<compile_context>
chip_gen: v5e
topology: v5e:2x2
jax: 0.10.0
libtpu: 0.0.40
codegen_flags: <defaults>
</compile_context>

<pallas_src>
import jax
import jax.numpy as jnp
from jax.experimental import pallas as pl
from jax.experimental.pallas import tpu as pltpu


def _round_up(n: int, m: int) -> int:
    return ((n + m - 1) // m) * m


def mlp_kernel(xT_ref, w1_ref, b1_ref, w2_ref, b2_ref, oT_ref):
    # xT_ref: [in, TB]   (batch on lanes)
    # w1_ref: [hid, in]  b1_ref: [hid, 1]
    # w2_ref: [out, hid] b2_ref: [out, 1]
    # oT_ref: [out, TB]
    h = jnp.dot(w1_ref[...], xT_ref[...], preferred_element_type=jnp.float32)
    h = jnp.maximum(h + b1_ref[...], 0.0)
    y = jnp.dot(w2_ref[...], h, preferred_element_type=jnp.float32)
    oT_ref[...] = (y + b2_ref[...]).astype(oT_ref.dtype)


def my_model_forward_T(xT, w1, b1, w2, b2, *, block_b: int = 32768):
    """Transpose-free hot path: activations stay in [feature, batch] layout.

    xT: [10, B] float32  ->  returns y^T: [10, B] float32
    w1: [20, 10], b1: [20], w2: [10, 20], b2: [10]  (PyTorch nn.Linear layout)
    """
    in_f, B = xT.shape
    hid = w1.shape[0]
    out_f = w2.shape[0]

    # --- Batch tile selection -------------------------------------------------
    # Cap at 32768 lanes: large enough to be HBM-bound on v5e/v6e/v7x, small
    # enough that the per-step VMEM footprint (~20 MiB, see below) fits v7x's
    # 32 MiB scoped VMEM.  Aim for >=2 grid steps so both v7x TensorCores get
    # work; for tiny B just take the whole batch as one full-extent block.
    block_b = max(128, min(block_b, 32768))
    TB = min(block_b, _round_up(-(-B // 2), 128))  # >=2 steps when B allows
    if TB >= B:
        TB = B  # single block spanning the full batch (full-dim block is always legal)
    grid = (pl.cdiv(B, TB),)  # no whole-batch padding; tail block is masked by Pallas

    # --- Honest VMEM budget ---------------------------------------------------
    # f32 tiles pad the sublane (feature) dim up to a multiple of 8 (10 -> 16,
    # 20 -> 24).  Per grid step:
    #   double-buffered x^T tile : 2 * 16 * TB * 4 B
    #   double-buffered y^T tile : 2 * 16 * TB * 4 B
    #   in-kernel intermediates  : ~3 * 24 * TB * 4 B  (h, relu(h), W2 @ h)
    step_bytes = (2 * 16 + 2 * 16 + 3 * 24) * TB * 4
    vmem_limit = max(8 << 20, min(step_bytes + (2 << 20), 30 << 20))

    yT = pl.pallas_call(
        mlp_kernel,
        out_shape=jax.ShapeDtypeStruct((out_f, B), xT.dtype),
        grid=grid,
        in_specs=[
            pl.BlockSpec((in_f, TB), lambda i: (0, i)),    # stream x^T tiles
            pl.BlockSpec((hid, in_f), lambda i: (0, 0)),   # W1: fetched once, resident
            pl.BlockSpec((hid, 1), lambda i: (0, 0)),      # b1: resident
            pl.BlockSpec((out_f, hid), lambda i: (0, 0)),  # W2: resident
            pl.BlockSpec((out_f, 1), lambda i: (0, 0)),    # b2: resident
        ],
        out_specs=pl.BlockSpec((out_f, TB), lambda i: (0, i)),
        compiler_params=pltpu.CompilerParams(
            # Independent batch tiles -> shard grid across both v7x TensorCores.
            dimension_semantics=("parallel",),
            vmem_limit_bytes=vmem_limit,
        ),
    )(xT, w1, b1.reshape(-1, 1), w2, b2.reshape(-1, 1))

    return yT


def my_model_forward(x, w1, b1, w2, b2, *, block_b: int = 32768):
    """PyTorch-layout convenience wrapper: x [B, 10] -> y [B, 10].

    NOTE: each .T here is a separate XLA transpose (a full HBM read+write of
    the activations).  For large batches keep activations in [feature, batch]
    layout in the surrounding model and call `my_model_forward_T` directly.
    """
    return my_model_forward_T(x.T, w1, b1, w2, b2, block_b=block_b).T


def init_params(key):
    """Deterministic init mimicking PyTorch nn.Linear default (uniform +/- 1/sqrt(fan_in)).

    Weights kept in PyTorch layout [out_features, in_features].
    """
    k1, k2, k3, k4 = jax.random.split(key, 4)
    in1, out1 = 10, 20
    in2, out2 = 20, 10
    bound1 = 1.0 / jnp.sqrt(in1)
    bound2 = 1.0 / jnp.sqrt(in2)
    w1 = jax.random.uniform(k1, (out1, in1), jnp.float32, -bound1, bound1)
    b1 = jax.random.uniform(k2, (out1,), jnp.float32, -bound1, bound1)
    w2 = jax.random.uniform(k3, (out2, in2), jnp.float32, -bound2, bound2)
    b2 = jax.random.uniform(k4, (out2,), jnp.float32, -bound2, bound2)
    return w1, b1, w2, b2


def _reference(x, w1, b1, w2, b2):
    return jnp.maximum(x @ w1.T + b1, 0.0) @ w2.T + b2


if __name__ == "__main__":
    key = jax.random.PRNGKey(0)
    k_params, k_x1, k_x2 = jax.random.split(key, 3)
    w1, b1, w2, b2 = init_params(k_params)

    # Small batch, PyTorch layout wrapper (single full-extent block, grid=1).
    x_small = jax.random.normal(k_x1, (8, 10), dtype=jnp.float32)
    out_small = jax.block_until_ready(my_model_forward(x_small, w1, b1, w2, b2))
    ref_small = _reference(x_small, w1, b1, w2, b2)
    assert out_small.shape == (8, 10)
    assert jnp.allclose(out_small, ref_small, atol=1e-5, rtol=1e-5)

    # Ragged batch, recommended [feature, batch] path: 2 grid steps of TB=384
    # (700 = 384 + masked tail of 316) -> exercises multi-step pipelining and
    # the masked partial tail block, with no wrapper-side pad or transpose.
    x_big = jax.random.normal(k_x2, (700, 10), dtype=jnp.float32)
    out_big_T = jax.block_until_ready(my_model_forward_T(x_big.T, w1, b1, w2, b2))
    ref_big = _reference(x_big, w1, b1, w2, b2)
    assert out_big_T.shape == (10, 700)
    assert jnp.allclose(out_big_T.T, ref_big, atol=1e-5, rtol=1e-5)

    print("KERNEL_OK")
</pallas_src>

<mosaic_0001>
module attributes {stable_mosaic.version = 11 : i64} {
  func.func @mlp_kernel(%arg0: i32, %arg1: memref<10x8xf32, #tpu.memory_space<vmem>>, %arg2: memref<20x10xf32, #tpu.memory_space<vmem>>, %arg3: memref<20x1xf32, #tpu.memory_space<vmem>>, %arg4: memref<10x20xf32, #tpu.memory_space<vmem>>, %arg5: memref<10x1xf32, #tpu.memory_space<vmem>>, %arg6: memref<10x8xf32, #tpu.memory_space<vmem>>) attributes {dimension_semantics = [#tpu.dimension_semantics<parallel>], iteration_bounds = array<i64: 1>, scalar_prefetch = 0 : i64, scratch_operands = 0 : i64, tpu.core_type = #tpu.core_type<tc>, window_params = [{transform_indices = @transform_0, window_bounds = array<i64: 10, 8>}, {pipeline_mode = #tpu.pipeline_mode<synchronous>, transform_indices = @transform_1, window_bounds = array<i64: 20, 10>}, {pipeline_mode = #tpu.pipeline_mode<synchronous>, transform_indices = @transform_2, window_bounds = array<i64: 20, 1>}, {pipeline_mode = #tpu.pipeline_mode<synchronous>, transform_indices = @transform_3, window_bounds = array<i64: 10, 20>}, {pipeline_mode = #tpu.pipeline_mode<synchronous>, transform_indices = @transform_4, window_bounds = array<i64: 10, 1>}, {transform_indices = @transform_5, window_bounds = array<i64: 10, 8>}]} {
    %c0 = arith.constant 0 : index
    %c0_0 = arith.constant 0 : index
    %0 = vector.load %arg2[%c0, %c0_0] : memref<20x10xf32, #tpu.memory_space<vmem>>, vector<20x10xf32>
    %c0_1 = arith.constant 0 : index
    %c0_2 = arith.constant 0 : index
    %1 = vector.load %arg1[%c0_1, %c0_2] : memref<10x8xf32, #tpu.memory_space<vmem>>, vector<10x8xf32>
    %cst = arith.constant dense<0.000000e+00> : vector<20x8xf32>
    %2 = tpu.matmul %0, %1, %cst {dimension_numbers = #tpu.dot_dimension_numbers<[1], [0], [0], [1], [0, 0, 1, 1], [], []>} : vector<20x10xf32>, vector<10x8xf32>, vector<20x8xf32> -> vector<20x8xf32>
    %c0_3 = arith.constant 0 : index
    %c0_4 = arith.constant 0 : index
    %3 = vector.load %arg3[%c0_3, %c0_4] : memref<20x1xf32, #tpu.memory_space<vmem>>, vector<20x1xf32>
    %4 = vector.broadcast %3 : vector<20x1xf32> to vector<20x8xf32>
    %5 = arith.addf %2, %4 : vector<20x8xf32>
    %cst_5 = arith.constant 0.000000e+00 : f32
    %6 = vector.broadcast %cst_5 : f32 to vector<20x8xf32>
    %7 = arith.maximumf %5, %6 : vector<20x8xf32>
    %c0_6 = arith.constant 0 : index
    %c0_7 = arith.constant 0 : index
    %8 = vector.load %arg4[%c0_6, %c0_7] : memref<10x20xf32, #tpu.memory_space<vmem>>, vector<10x20xf32>
    %cst_8 = arith.constant dense<0.000000e+00> : vector<10x8xf32>
    %9 = tpu.matmul %8, %7, %cst_8 {dimension_numbers = #tpu.dot_dimension_numbers<[1], [0], [0], [1], [0, 0, 1, 1], [], []>} : vector<10x20xf32>, vector<20x8xf32>, vector<10x8xf32> -> vector<10x8xf32>
    %c0_9 = arith.constant 0 : index
    %c0_10 = arith.constant 0 : index
    %10 = vector.load %arg5[%c0_9, %c0_10] : memref<10x1xf32, #tpu.memory_space<vmem>>, vector<10x1xf32>
    %11 = vector.broadcast %10 : vector<10x1xf32> to vector<10x8xf32>
    %12 = arith.addf %9, %11 : vector<10x8xf32>
    %c0_11 = arith.constant 0 : index
    %c0_12 = arith.constant 0 : index
    %13 = vector.load %arg6[%c0_11, %c0_12] : memref<10x8xf32, #tpu.memory_space<vmem>>, vector<10x8xf32>
    tpu.vector_store %arg6[%c0_11, %c0_12], %12 {strides = array<i32>} : memref<10x8xf32, #tpu.memory_space<vmem>>, vector<10x8xf32>,
    return
  }
  func.func @transform_0(%arg0: i32) -> (i32, i32) {
    %c0_i32 = arith.constant 0 : i32
    %c0_i32_0 = arith.constant 0 : i32
    return %c0_i32, %arg0 : i32, i32
  }
  func.func @transform_1(%arg0: i32) -> (i32, i32) {
    %c0_i32 = arith.constant 0 : i32
    %c0_i32_0 = arith.constant 0 : i32
    %c0_i32_1 = arith.constant 0 : i32
    return %c0_i32, %c0_i32_0 : i32, i32
  }
  func.func @transform_2(%arg0: i32) -> (i32, i32) {
    %c0_i32 = arith.constant 0 : i32
    %c0_i32_0 = arith.constant 0 : i32
    %c0_i32_1 = arith.constant 0 : i32
    return %c0_i32, %c0_i32_0 : i32, i32
  }
  func.func @transform_3(%arg0: i32) -> (i32, i32) {
    %c0_i32 = arith.constant 0 : i32
    %c0_i32_0 = arith.constant 0 : i32
    %c0_i32_1 = arith.constant 0 : i32
    return %c0_i32, %c0_i32_0 : i32, i32
  }
  func.func @transform_4(%arg0: i32) -> (i32, i32) {
    %c0_i32 = arith.constant 0 : i32
    %c0_i32_0 = arith.constant 0 : i32
    %c0_i32_1 = arith.constant 0 : i32
    return %c0_i32, %c0_i32_0 : i32, i32
  }
  func.func @transform_5(%arg0: i32) -> (i32, i32) {
    %c0_i32 = arith.constant 0 : i32
    %c0_i32_0 = arith.constant 0 : i32
    return %c0_i32, %arg0 : i32, i32
  }
}

</mosaic_0001>

<llo_original>
// kernel: tpu_custom_call.1
$region0: #{tpu_custom_call.1}
  #allocation0 [shape = 'u32[]', space=smem, size = 0x4, offset = 0x4, fixed_abs, tag = 'smem constant byte address 0x4 - core index']
  #allocation1 [shape = 'u32[72,128]{1,0:T(1,128)}', space=vmem, size = 0x9000, scoped, tag = 'internal scratch']
  %s0 = inlined_call_operand.vmem [shape: f32[10,8], index: 0, kind: input, shape index: {}]
  %s1 = inlined_call_operand.vmem [shape: f32[20,10], index: 1, kind: input, shape index: {}]
  %s2 = inlined_call_operand.vmem [shape: f32[20,1], index: 2, kind: input, shape index: {}]
  %s3 = inlined_call_operand.vmem [shape: f32[10,20], index: 3, kind: input, shape index: {}]
  %s4 = inlined_call_operand.vmem [shape: f32[10,1], index: 4, kind: input, shape index: {}]
  %s5 = inlined_call_operand.vmem [shape: f32[10,8], index: 5, kind: output, shape index: {}]
  %s6 = sld [smem:[#allocation0]]
  $region30: #{tpu_custom_call.1} parent=0
    _
  %s8 = ssub.s32 1, %s6
  %s9 = scalar_select 0, %s8, %s6
  // Predicated region
  $region2: #{tpu_custom_call.1} parent=0 // pred_check
    _
  $region3: #{tpu_custom_call.1} parent=0 // pred_check_branch
    %11 = sbr.rel (0) target = $region5
  $region4: #{tpu_custom_call.1} parent=0 // pred_region
    _
  $region5: #{tpu_custom_call.1} parent=0 // pred_fallthru
    _
  // Predicated region
  $region6: #{tpu_custom_call.1} parent=0 // pred_check
    _
  $region7: #{tpu_custom_call.1} parent=0 // pred_check_branch
    %13 = sbr.rel (0) target = $region9
  $region8: #{tpu_custom_call.1} parent=0 // pred_region
    _
  $region9: #{tpu_custom_call.1} parent=0 // pred_fallthru
    _
  // Predicated region
  $region10: #{tpu_custom_call.1} parent=0 // pred_check
    _
  $region11: #{tpu_custom_call.1} parent=0 // pred_check_branch
    %15 = sbr.rel (0) target = $region13
  $region12: #{tpu_custom_call.1} parent=0 // pred_region
    _
  $region13: #{tpu_custom_call.1} parent=0 // pred_fallthru
    _
  // Predicated region
  $region14: #{tpu_custom_call.1} parent=0 // pred_check
    _
  $region15: #{tpu_custom_call.1} parent=0 // pred_check_branch
    %17 = sbr.rel (0) target = $region17
  $region16: #{tpu_custom_call.1} parent=0 // pred_region
    _
  $region17: #{tpu_custom_call.1} parent=0 // pred_fallthru
    _
  // Predicated region
  $region18: #{tpu_custom_call.1} parent=0 // pred_check
    _
  $region19: #{tpu_custom_call.1} parent=0 // pred_check_branch
    %19 = sbr.rel (0) target = $region21
  $region20: #{tpu_custom_call.1} parent=0 // pred_region
    _
  $region21: #{tpu_custom_call.1} parent=0 // pred_fallthru
    _
  %v20 = vld [vmem:[%s1] sm:$0xff]
  %v21 = vld [vmem:[%s1 + $0x8] sm:$0xff]
  %v22 = vld [vmem:[%s1 + $0x10] sm:$0xf]
  %v23 = vld [vmem:[%s0] sm:$0xff]
  %v24 = vld [vmem:[%s0 + $0x8] sm:$0x3]
  %v25 = vld [vmem:[%s2] sm:$0xff]
  %v26 = vld [vmem:[%s2 + $0x8] sm:$0xff]
  %v27 = vld [vmem:[%s2 + $0x10] sm:$0xf]
  %29 = vset.pattern.permute.xlu0 0
  %30 = vperm.xlu0 %29, %v25
  %v31 = vpop.permute.xlu0 %30
  %34 = vset.pattern.permute.xlu0 0
  %35 = vperm.xlu0 %34, %v26
  %v36 = vpop.permute.xlu0 %35
  %39 = vset.pattern.permute.xlu0 0
  %40 = vperm.xlu0 %39, %v27
  %v41 = vpop.permute.xlu0 %40
  %vm43 = vcmask 80896
  %v45 = vsel %vm43, %v20, 0
  %v48 = vsel %vm43, %v21, 0
  %v51 = vsel %vm43, %v22, 0
  %vm53 = vcmask 1041408
  %v55 = vsel %vm53, %v24, 0
  %57 = vmatpush.msra.mxu0 0.0
  %58 = vmatpush.msra.mxu0 0.0
  %59 = vmatpush.msra.mxu0 0.0
  %60 = vmatpush.msra.mxu0 0.0
  %61 = vmatpush.msra.mxu0 0.0
  %62 = vmatpush.msra.mxu0 0.0
  %63 = vmatpush.msra.mxu0 0.0
  %64 = vmatpush.msra.mxu0 0.0
  %65 = vmatpush.msra.mxu0 0.0
  %66 = vmatpush.msra.mxu0 0.0
  %67 = vmatpush.msra.mxu0 0.0
  %68 = vmatpush.msra.mxu0 0.0
  %69 = vmatpush.msra.mxu0 0.0
  %70 = vmatpush.msra.mxu0 0.0
  %71 = vmatpush.msra.mxu0 %v55
  %72 = vmatpush.msra.mxu0 %v23
  %73 = vmatmul.f32.gmra.mxu0 %v45
  %v74 = vpop.f32.mrf.mxu0
  %v75 = vadd.f32 %v31, %v74
  %76 = vmatmul.f32.gmra.mxu0 %v48
  %v77 = vpop.f32.mrf.mxu0
  %v78 = vadd.f32 %v36, %v77
  %79 = vmatmul.f32.gmra.mxu0 %v51
  %v80 = vpop.f32.mrf.mxu0
  %v81 = vadd.f32 %v41, %v80
  %82 = vdwg.mxu0
  %v83 = vmax.f32 %v75, 0.0
  %v84 = vmax.f32 %v78, 0.0
  %v85 = vmax.f32 %v81, 0.0
  %v86 = vld [vmem:[%s3] sm:$0xff]
  %v87 = vld [vmem:[%s3 + $0x8] sm:$0x3]
  %v88 = vld [vmem:[%s4] sm:$0xff]
  %v89 = vld [vmem:[%s4 + $0x8] sm:$0x3]
  %91 = vset.pattern.permute.xlu0 0
  %92 = vperm.xlu0 %91, %v88
  %v93 = vpop.permute.xlu0 %92
  %96 = vset.pattern.permute.xlu0 0
  %97 = vperm.xlu0 %96, %v89
  %v98 = vpop.permute.xlu0 %97
  %vm100 = vcmask 162816
  %v102 = vsel %vm100, %v86, 0
  %v105 = vsel %vm100, %v87, 0
  %vm107 = vcmask 1043456
  %v109 = vsel %vm107, %v85, 0
  %111 = vmatpush.msra.mxu0 0.0
  %112 = vmatpush.msra.mxu0 0.0
  %113 = vmatpush.msra.mxu0 0.0
  %114 = vmatpush.msra.mxu0 0.0
  %115 = vmatpush.msra.mxu0 0.0
  %116 = vmatpush.msra.mxu0 0.0
  %117 = vmatpush.msra.mxu0 0.0
  %118 = vmatpush.msra.mxu0 0.0
  %119 = vmatpush.msra.mxu0 0.0
  %120 = vmatpush.msra.mxu0 0.0
  %121 = vmatpush.msra.mxu0 0.0
  %122 = vmatpush.msra.mxu0 0.0
  %123 = vmatpush.msra.mxu0 0.0
  %124 = vmatpush.msra.mxu0 %v109
  %125 = vmatpush.msra.mxu0 %v84
  %126 = vmatpush.msra.mxu0 %v83
  %127 = vmatmul.f32.gmra.mxu0 %v102
  %v128 = vpop.f32.mrf.mxu0
  %v129 = vadd.f32 %v93, %v128
  %130 = vmatmul.f32.gmra.mxu0 %v105
  %v131 = vpop.f32.mrf.mxu0
  %v132 = vadd.f32 %v98, %v131
  %133 = vdwg.mxu0
  %vm134 = vcmask 64512
  %135 = vst.msk [vmem:[%s5] sm:$0xff] %vm134, %v129
  %vm136 = vcmask 58368
  %137 = vst.msk [vmem:[%s5 + $0x8] sm:$0x3] %vm136, %v132
  // Predicated region
  $region22: #{tpu_custom_call.1} parent=0 // pred_check
    _
  $region23: #{tpu_custom_call.1} parent=0 // pred_check_branch
    %139 = sbr.rel (0) target = $region25
  $region24: #{tpu_custom_call.1} parent=0 // pred_region
    _
  $region25: #{tpu_custom_call.1} parent=0 // pred_fallthru
    _
  // Predicated region
  $region26: #{tpu_custom_call.1} parent=0 // pred_check
    _
  $region27: #{tpu_custom_call.1} parent=0 // pred_check_branch
    %141 = sbr.rel (0) target = $region29
  $region28: #{tpu_custom_call.1} parent=0 // pred_region
    _
  $region29: #{tpu_custom_call.1} parent=0 // pred_fallthru
    _

</llo_original>
